<compile_context>
chip_gen: v5e
topology: v5e:2x2
jax: 0.10.0
libtpu: 0.0.40
codegen_flags: <defaults>
</compile_context>

<pallas_src>
import functools

import jax
import jax.numpy as jnp
from jax.experimental import pallas as pl
from jax.experimental.pallas import tpu as pltpu

EPS = 1e-5


def dwconv_bn_kernel(x_ref, w_ref, mask_ref, gamma_ref, beta_ref, o_ref,
                     cache_ref, sum_ref, sq_ref, *,
                     KH, KW, H, W, N_blk, inv_count, cache_conv):
    """Blocks:
       x_ref:     (N_blk, c_blk, H*W)  batch-folded block, channels on sublanes,
                                       flattened spatial on the lane axis.
       w_ref:     (c_blk, KH*KW)       depthwise taps (resident).
       mask_ref:  (KH*KW, H*W) f32     0/1 'same'-padding validity per tap (resident).
       gamma_ref: (c_blk, 1), beta_ref: (c_blk, 1)  BN affine params.
       o_ref:     (N_blk, c_blk, H*W)
       cache_ref: (N_total, c_blk, H*W) f32 persistent conv cache (sweep 0 -> 1).
       sum_ref/sq_ref: (c_blk, 1) f32 persistent per-channel statistics.
    """
    s = pl.program_id(1)      # 0 = conv + statistics sweep, 1 = normalize sweep
    n = pl.program_id(2)      # batch block
    HW = H * W
    ph, pw = KH // 2, KW // 2

    w = w_ref[...].astype(jnp.float32)        # (c_blk, KH*KW)
    mask = mask_ref[...]                      # (KH*KW, HW) f32 0/1

    def conv_one(xb):                         # xb: (c_blk, HW) f32
        acc = jnp.zeros(xb.shape, jnp.float32)
        for kh in range(KH):
            for kw in range(KW):
                t = kh * KW + kw
                d = (kh - ph) * W + (kw - pw)
                shifted = pltpu.roll(xb, shift=(-d) % HW, axis=1) if d != 0 else xb
                if d != 0:
                    # Zero out the wrapped-around / out-of-image taps: one vmul
                    # against the resident 0/1 mask row.
                    shifted = shifted * mask[t:t + 1, :]
                acc = acc + shifted * w[:, t:t + 1]
        return acc
    # NOTE: the conv bias is intentionally dropped -- training-mode batch-norm
    # subtracts the per-channel mean, which cancels it exactly.  (Reinstate it
    # if this kernel is ever reused with eval-mode / running statistics.)

    @pl.when((s == 0) & (n == 0))
    def _init_stats():
        sum_ref[...] = jnp.zeros_like(sum_ref)
        sq_ref[...] = jnp.zeros_like(sq_ref)

    @pl.when(s == 0)
    def _conv_and_stats():
        for b in range(N_blk):
            xb = x_ref[b].astype(jnp.float32)         # (c_blk, HW)
            acc = conv_one(xb)
            sum_ref[...] += jnp.sum(acc, axis=1, keepdims=True)
            sq_ref[...] += jnp.sum(acc * acc, axis=1, keepdims=True)
            if cache_conv:
                cache_ref[n * N_blk + b] = acc        # stash for sweep 1
            # Safety: keep the (parked) output buffer initialized so a flush
            # can never write garbage; it is overwritten during sweep 1 before
            # its block index ever changes.
            o_ref[b] = acc.astype(o_ref.dtype)

    @pl.when(s == 1)
    def _normalize_and_store():
        mean = sum_ref[...] * inv_count                             # (c_blk, 1)
        var = jnp.maximum(sq_ref[...] * inv_count - mean * mean, 0.0)
        scale = gamma_ref[...].astype(jnp.float32) * jax.lax.rsqrt(var + EPS)
        shift = beta_ref[...].astype(jnp.float32) - mean * scale
        for b in range(N_blk):
            if cache_conv:
                acc = cache_ref[n * N_blk + b]                      # no recompute
            else:
                acc = conv_one(x_ref[b].astype(jnp.float32))        # fallback
            # Folded BN: one fused multiply-add pass, lane-dense store.
            o_ref[b] = (acc * scale + shift).astype(o_ref.dtype)


def depthwise_conv_bn(x_nchw, weight, bias, gamma, beta, *,
                      vmem_cache_budget=8 * 1024 * 1024):
    """x_nchw: (N, C, H, W); weight: (C, 1, KH, KW) (PyTorch depthwise layout)."""
    del bias  # exactly cancelled by the training-mode BN mean subtraction
    N, C, H, W = x_nchw.shape
    KH, KW = int(weight.shape[2]), int(weight.shape[3])
    HW = H * W
    ph, pw = KH // 2, KW // 2

    # Free (metadata-only) reshapes -- no pad / transpose HBM round trips.
    x_flat = x_nchw.reshape(N, C, HW)
    w_flat = weight.reshape(C, KH * KW)
    gamma2 = gamma.reshape(C, 1)
    beta2 = beta.reshape(C, 1)

    # Per-tap 0/1 validity table for 'same' zero padding, built once on the
    # host and kept resident in VMEM (tap = roll + one vmul inside the kernel).
    col = jnp.arange(HW, dtype=jnp.int32)
    hh, ww = col // W, col % W
    rows = []
    for kh in range(KH):
        for kw in range(KW):
            dh, dw = kh - ph, kw - pw
            valid = ((hh + dh >= 0) & (hh + dh < H) &
                     (ww + dw >= 0) & (ww + dw < W))
            rows.append(valid.astype(jnp.float32))
    mask_tbl = jnp.stack(rows, axis=0)                 # (KH*KW, HW)

    # Channel blocking: split into two multiple-of-8 blocks when possible so
    # the "parallel" axis feeds v7x's second TensorCore; tiny C -> one block.
    c_blk = C // 2 if (C % 16 == 0) else C
    n_cblk = C // c_blk
    # TODO(synk): for tiny-C, large-HW configs, make a spatial-tile axis the
    # parallel one (per-tile partial sums + a small finalize pass) so v7x's
    # second core is still used.

    # Batch folding: whole batch in one fat block for test-sized problems.
    n_blk = N
    n_nblk = N // n_blk
    # TODO(synk): for large N*H*W, derive n_blk from the VMEM budget and tile
    # H*W on the lane axis with a (KH-1)-row halo; size ~8-12 MiB/step on
    # v7x (64 MiB VMEM), ~2x that on v5e/v6e (raise vmem_limit_bytes there).

    # Single-read structure: cache the sweep-0 conv output in VMEM so sweep 1
    # skips both the conv recompute and the second HBM read of x, as long as
    # the cache fits a per-generation VMEM budget.
    cache_bytes = N * c_blk * HW * 4
    cache_conv = cache_bytes <= vmem_cache_budget
    cache_shape = (N, c_blk, HW) if cache_conv else (1, c_blk, HW)

    if cache_conv:
        # Park x on its last sweep-0 block during sweep 1 -> zero re-DMA.
        x_map = lambda c, s, n: (n * (1 - s) + (n_nblk - 1) * s, c, 0)
    else:
        x_map = lambda c, s, n: (n, c, 0)

    kernel = functools.partial(
        dwconv_bn_kernel, KH=KH, KW=KW, H=H, W=W, N_blk=n_blk,
        inv_count=1.0 / float(N * H * W), cache_conv=cache_conv)

    out_flat = pl.pallas_call(
        kernel,
        out_shape=jax.ShapeDtypeStruct((N, C, HW), x_nchw.dtype),
        grid_spec=pltpu.PrefetchScalarGridSpec(
            num_scalar_prefetch=0,
            grid=(n_cblk, 2, n_nblk),            # (channel blocks, sweep, batch blocks)
            in_specs=[
                pl.BlockSpec((n_blk, c_blk, HW), x_map),
                pl.BlockSpec((c_blk, KH * KW), lambda c, s, n: (c, 0)),
                pl.BlockSpec((KH * KW, HW), lambda c, s, n: (0, 0)),
                pl.BlockSpec((c_blk, 1), lambda c, s, n: (c, 0)),
                pl.BlockSpec((c_blk, 1), lambda c, s, n: (c, 0)),
            ],
            # Sweep 0 parks the output on block (0, c, 0); that block is always
            # (re)written by sweep 1, n=0 before its index ever changes, and it
            # is also written with the raw conv during sweep 0 so no flush can
            # ever emit an uninitialized buffer.
            out_specs=pl.BlockSpec((n_blk, c_blk, HW),
                                   lambda c, s, n: (n * s, c, 0)),
            scratch_shapes=[pltpu.VMEM(cache_shape, jnp.float32),
                            pltpu.VMEM((c_blk, 1), jnp.float32),
                            pltpu.VMEM((c_blk, 1), jnp.float32)],
        ),
        compiler_params=pltpu.CompilerParams(
            dimension_semantics=("parallel", "arbitrary", "arbitrary")),
    )(x_flat, w_flat, mask_tbl, gamma2, beta2)

    return out_flat.reshape(N, C, H, W)


def reference(x_nchw, weight, bias, gamma, beta):
    """Pure-JAX reference (depthwise conv + bias + training-mode BN), NCHW."""
    N, C, H, W = x_nchw.shape
    x_nhwc = jnp.transpose(x_nchw, (0, 2, 3, 1)).astype(jnp.float32)
    w_hwio = jnp.transpose(weight, (2, 3, 1, 0)).astype(jnp.float32)  # (KH,KW,1,C)
    y = jax.lax.conv_general_dilated(
        x_nhwc, w_hwio, window_strides=(1, 1), padding="SAME",
        dimension_numbers=("NHWC", "HWIO", "NHWC"), feature_group_count=C)
    y = y + bias.astype(jnp.float32)
    mean = jnp.mean(y, axis=(0, 1, 2), keepdims=True)
    var = jnp.mean((y - mean) ** 2, axis=(0, 1, 2), keepdims=True)
    y = (y - mean) * jax.lax.rsqrt(var + EPS)
    y = y * gamma.astype(jnp.float32) + beta.astype(jnp.float32)
    return jnp.transpose(y, (0, 3, 1, 2)).astype(x_nchw.dtype)


if __name__ == "__main__":
    # DepthwiseConvBN(in_channels=4, out_channels=4, kernel_size=3, padding='same')
    N, C, H, W, K = 2, 4, 16, 16, 3

    key = jax.random.PRNGKey(0)
    kx, kw, kb, kg, kbe = jax.random.split(key, 5)

    x = jax.random.normal(kx, (N, C, H, W), dtype=jnp.float32)
    # Conv2d weight for groups=in_channels: (out_channels, 1, KH, KW)
    weight = jax.random.normal(kw, (C, 1, K, K), dtype=jnp.float32) * 0.1
    bias = jax.random.normal(kb, (C,), dtype=jnp.float32) * 0.1
    # Non-trivial BN affine params to exercise the folded scale/shift path.
    gamma = 1.0 + 0.1 * jax.random.normal(kg, (C,), dtype=jnp.float32)
    beta = 0.1 * jax.random.normal(kbe, (C,), dtype=jnp.float32)

    out = depthwise_conv_bn(x, weight, bias, gamma, beta)
    out = jax.block_until_ready(out)

    ref = reference(x, weight, bias, gamma, beta)
    assert out.shape == (N, C, H, W)
    assert jnp.max(jnp.abs(out - ref)) < 1e-4

    print("KERNEL_OK")
</pallas_src>

<mosaic_0001>
module attributes {stable_mosaic.version = 11 : i64} {
  func.func @dwconv_bn_kernel(%arg0: i32, %arg1: i32, %arg2: i32, %arg3: memref<2x4x256xf32, #tpu.memory_space<vmem>>, %arg4: memref<4x9xf32, #tpu.memory_space<vmem>>, %arg5: memref<9x256xf32, #tpu.memory_space<vmem>>, %arg6: memref<4x1xf32, #tpu.memory_space<vmem>>, %arg7: memref<4x1xf32, #tpu.memory_space<vmem>>, %arg8: memref<2x4x256xf32, #tpu.memory_space<vmem>>, %arg9: memref<2x4x256xf32, #tpu.memory_space<vmem>>, %arg10: memref<4x1xf32, #tpu.memory_space<vmem>>, %arg11: memref<4x1xf32, #tpu.memory_space<vmem>>) attributes {dimension_semantics = [#tpu.dimension_semantics<parallel>, #tpu.dimension_semantics<arbitrary>, #tpu.dimension_semantics<arbitrary>], iteration_bounds = array<i64: 1, 2, 1>, scalar_prefetch = 0 : i64, scratch_operands = 3 : i64, tpu.core_type = #tpu.core_type<tc>, window_params = [{transform_indices = @transform_0, window_bounds = array<i64: 2, 4, 256>}, {transform_indices = @transform_1, window_bounds = array<i64: 4, 9>}, {pipeline_mode = #tpu.pipeline_mode<synchronous>, transform_indices = @transform_2, window_bounds = array<i64: 9, 256>}, {transform_indices = @transform_3, window_bounds = array<i64: 4, 1>}, {transform_indices = @transform_4, window_bounds = array<i64: 4, 1>}, {transform_indices = @transform_5, window_bounds = array<i64: 2, 4, 256>}]} {
    %c0 = arith.constant 0 : index
    %c0_0 = arith.constant 0 : index
    %0 = vector.load %arg4[%c0, %c0_0] : memref<4x9xf32, #tpu.memory_space<vmem>>, vector<4x9xf32>
    %c0_1 = arith.constant 0 : index
    %c0_2 = arith.constant 0 : index
    %1 = vector.load %arg5[%c0_1, %c0_2] : memref<9x256xf32, #tpu.memory_space<vmem>>, vector<9x256xf32>
    %c0_i32 = arith.constant 0 : i32
    %2 = arith.cmpi eq, %arg1, %c0_i32 : i32
    %c0_i32_3 = arith.constant 0 : i32
    %3 = arith.cmpi eq, %arg2, %c0_i32_3 : i32
    %4 = arith.andi %2, %3 : i1
    %5 = arith.extui %4 : i1 to i32
    %c0_i32_4 = arith.constant 0 : i32
    %6 = arith.cmpi ne, %5, %c0_i32_4 : i32
    scf.if %6 {
      %cst = arith.constant 0.000000e+00 : f32
      %13 = vector.broadcast %cst : f32 to vector<4x1xf32>
      %c0_8 = arith.constant 0 : index
      %c0_9 = arith.constant 0 : index
      %14 = vector.load %arg10[%c0_8, %c0_9] : memref<4x1xf32, #tpu.memory_space<vmem>>, vector<4x1xf32>
      tpu.vector_store %arg10[%c0_8, %c0_9], %13 {strides = array<i32>} : memref<4x1xf32, #tpu.memory_space<vmem>>, vector<4x1xf32>,
      %cst_10 = arith.constant 0.000000e+00 : f32
      %15 = vector.broadcast %cst_10 : f32 to vector<4x1xf32>
      %c0_11 = arith.constant 0 : index
      %c0_12 = arith.constant 0 : index
      %16 = vector.load %arg11[%c0_11, %c0_12] : memref<4x1xf32, #tpu.memory_space<vmem>>, vector<4x1xf32>
      tpu.vector_store %arg11[%c0_11, %c0_12], %15 {strides = array<i32>} : memref<4x1xf32, #tpu.memory_space<vmem>>, vector<4x1xf32>,
    } else {
    }
    %c0_i32_5 = arith.constant 0 : i32
    %7 = arith.cmpi eq, %arg1, %c0_i32_5 : i32
    %8 = arith.extui %7 : i1 to i32
    %c0_i32_6 = arith.constant 0 : i32
    %9 = arith.cmpi ne, %8, %c0_i32_6 : i32
    scf.if %9 {
      %c0_8 = arith.constant 0 : index
      %c0_9 = arith.constant 0 : index
      %c0_10 = arith.constant 0 : index
      %13 = vector.load %arg3[%c0_8, %c0_9, %c0_10] : memref<2x4x256xf32, #tpu.memory_space<vmem>>, vector<1x4x256xf32>
      %14 = vector.shape_cast %13 : vector<1x4x256xf32> to vector<4x256xf32>
      %cst = arith.constant 0.000000e+00 : f32
      %15 = vector.broadcast %cst : f32 to vector<4x256xf32>
      %c17_i32 = arith.constant 17 : i32
      %16 = tpu.dynamic_rotate %14 by %c17_i32 dim 1 : vector<4x256xf32>, i32 -> vector<4x256xf32>
      %17 = vector.extract_strided_slice %1 {offsets = [0, 0], sizes = [1, 256], strides = [1, 1]} : vector<9x256xf32> to vector<1x256xf32>
      %18 = vector.broadcast %17 : vector<1x256xf32> to vector<4x256xf32>
      %19 = arith.mulf %16, %18 : vector<4x256xf32>
      %20 = vector.extract_strided_slice %0 {offsets = [0, 0], sizes = [4, 1], strides = [1, 1]} : vector<4x9xf32> to vector<4x1xf32>
      %21 = vector.broadcast %20 : vector<4x1xf32> to vector<4x256xf32>
      %22 = arith.mulf %19, %21 : vector<4x256xf32>
      %23 = arith.addf %15, %22 : vector<4x256xf32>
      %c16_i32 = arith.constant 16 : i32
      %24 = tpu.dynamic_rotate %14 by %c16_i32 dim 1 : vector<4x256xf32>, i32 -> vector<4x256xf32>
      %25 = vector.extract_strided_slice %1 {offsets = [1, 0], sizes = [1, 256], strides = [1, 1]} : vector<9x256xf32> to vector<1x256xf32>
      %26 = vector.broadcast %25 : vector<1x256xf32> to vector<4x256xf32>
      %27 = arith.mulf %24, %26 : vector<4x256xf32>
      %28 = vector.extract_strided_slice %0 {offsets = [0, 1], sizes = [4, 1], strides = [1, 1]} : vector<4x9xf32> to vector<4x1xf32>
      %29 = vector.broadcast %28 : vector<4x1xf32> to vector<4x256xf32>
      %30 = arith.mulf %27, %29 : vector<4x256xf32>
      %31 = arith.addf %23, %30 : vector<4x256xf32>
      %c15_i32 = arith.constant 15 : i32
      %32 = tpu.dynamic_rotate %14 by %c15_i32 dim 1 : vector<4x256xf32>, i32 -> vector<4x256xf32>
      %33 = vector.extract_strided_slice %1 {offsets = [2, 0], sizes = [1, 256], strides = [1, 1]} : vector<9x256xf32> to vector<1x256xf32>
      %34 = vector.broadcast %33 : vector<1x256xf32> to vector<4x256xf32>
      %35 = arith.mulf %32, %34 : vector<4x256xf32>
      %36 = vector.extract_strided_slice %0 {offsets = [0, 2], sizes = [4, 1], strides = [1, 1]} : vector<4x9xf32> to vector<4x1xf32>
      %37 = vector.broadcast %36 : vector<4x1xf32> to vector<4x256xf32>
      %38 = arith.mulf %35, %37 : vector<4x256xf32>
      %39 = arith.addf %31, %38 : vector<4x256xf32>
      %c1_i32_11 = arith.constant 1 : i32
      %40 = tpu.dynamic_rotate %14 by %c1_i32_11 dim 1 : vector<4x256xf32>, i32 -> vector<4x256xf32>
      %41 = vector.extract_strided_slice %1 {offsets = [3, 0], sizes = [1, 256], strides = [1, 1]} : vector<9x256xf32> to vector<1x256xf32>
      %42 = vector.broadcast %41 : vector<1x256xf32> to vector<4x256xf32>
      %43 = arith.mulf %40, %42 : vector<4x256xf32>
      %44 = vector.extract_strided_slice %0 {offsets = [0, 3], sizes = [4, 1], strides = [1, 1]} : vector<4x9xf32> to vector<4x1xf32>
      %45 = vector.broadcast %44 : vector<4x1xf32> to vector<4x256xf32>
      %46 = arith.mulf %43, %45 : vector<4x256xf32>
      %47 = arith.addf %39, %46 : vector<4x256xf32>
      %48 = vector.extract_strided_slice %0 {offsets = [0, 4], sizes = [4, 1], strides = [1, 1]} : vector<4x9xf32> to vector<4x1xf32>
      %49 = vector.broadcast %48 : vector<4x1xf32> to vector<4x256xf32>
      %50 = arith.mulf %14, %49 : vector<4x256xf32>
      %51 = arith.addf %47, %50 : vector<4x256xf32>
      %c255_i32 = arith.constant 255 : i32
      %52 = tpu.dynamic_rotate %14 by %c255_i32 dim 1 : vector<4x256xf32>, i32 -> vector<4x256xf32>
      %53 = vector.extract_strided_slice %1 {offsets = [5, 0], sizes = [1, 256], strides = [1, 1]} : vector<9x256xf32> to vector<1x256xf32>
      %54 = vector.broadcast %53 : vector<1x256xf32> to vector<4x256xf32>
      %55 = arith.mulf %52, %54 : vector<4x256xf32>
      %56 = vector.extract_strided_slice %0 {offsets = [0, 5], sizes = [4, 1], strides = [1, 1]} : vector<4x9xf32> to vector<4x1xf32>
      %57 = vector.broadcast %56 : vector<4x1xf32> to vector<4x256xf32>
      %58 = arith.mulf %55, %57 : vector<4x256xf32>
      %59 = arith.addf %51, %58 : vector<4x256xf32>
      %c241_i32 = arith.constant 241 : i32
      %60 = tpu.dynamic_rotate %14 by %c241_i32 dim 1 : vector<4x256xf32>, i32 -> vector<4x256xf32>
      %61 = vector.extract_strided_slice %1 {offsets = [6, 0], sizes = [1, 256], strides = [1, 1]} : vector<9x256xf32> to vector<1x256xf32>
      %62 = vector.broadcast %61 : vector<1x256xf32> to vector<4x256xf32>
      %63 = arith.mulf %60, %62 : vector<4x256xf32>
      %64 = vector.extract_strided_slice %0 {offsets = [0, 6], sizes = [4, 1], strides = [1, 1]} : vector<4x9xf32> to vector<4x1xf32>
      %65 = vector.broadcast %64 : vector<4x1xf32> to vector<4x256xf32>
      %66 = arith.mulf %63, %65 : vector<4x256xf32>
      %67 = arith.addf %59, %66 : vector<4x256xf32>
      %c240_i32 = arith.constant 240 : i32
      %68 = tpu.dynamic_rotate %14 by %c240_i32 dim 1 : vector<4x256xf32>, i32 -> vector<4x256xf32>
      %69 = vector.extract_strided_slice %1 {offsets = [7, 0], sizes = [1, 256], strides = [1, 1]} : vector<9x256xf32> to vector<1x256xf32>
      %70 = vector.broadcast %69 : vector<1x256xf32> to vector<4x256xf32>
      %71 = arith.mulf %68, %70 : vector<4x256xf32>
      %72 = vector.extract_strided_slice %0 {offsets = [0, 7], sizes = [4, 1], strides = [1, 1]} : vector<4x9xf32> to vector<4x1xf32>
      %73 = vector.broadcast %72 : vector<4x1xf32> to vector<4x256xf32>
      %74 = arith.mulf %71, %73 : vector<4x256xf32>
      %75 = arith.addf %67, %74 : vector<4x256xf32>
      %c239_i32 = arith.constant 239 : i32
      %76 = tpu.dynamic_rotate %14 by %c239_i32 dim 1 : vector<4x256xf32>, i32 -> vector<4x256xf32>
      %77 = vector.extract_strided_slice %1 {offsets = [8, 0], sizes = [1, 256], strides = [1, 1]} : vector<9x256xf32> to vector<1x256xf32>
      %78 = vector.broadcast %77 : vector<1x256xf32> to vector<4x256xf32>
      %79 = arith.mulf %76, %78 : vector<4x256xf32>
      %80 = vector.extract_strided_slice %0 {offsets = [0, 8], sizes = [4, 1], strides = [1, 1]} : vector<4x9xf32> to vector<4x1xf32>
      %81 = vector.broadcast %80 : vector<4x1xf32> to vector<4x256xf32>
      %82 = arith.mulf %79, %81 : vector<4x256xf32>
      %83 = arith.addf %75, %82 : vector<4x256xf32>
      %c0_12 = arith.constant 0 : index
      %c0_13 = arith.constant 0 : index
      %84 = vector.load %arg10[%c0_12, %c0_13] : memref<4x1xf32, #tpu.memory_space<vmem>>, vector<4x1xf32>
      %cst_14 = arith.constant dense<0.000000e+00> : vector<4xf32>
      %85 = vector.multi_reduction <add>, %83, %cst_14 [1] : vector<4x256xf32> to vector<4xf32>
      %86 = vector.shape_cast %85 : vector<4xf32> to vector<4x1xf32>
      %87 = arith.addf %84, %86 : vector<4x1xf32>
      %c0_15 = arith.constant 0 : index
      %c0_16 = arith.constant 0 : index
      %88 = vector.load %arg10[%c0_15, %c0_16] : memref<4x1xf32, #tpu.memory_space<vmem>>, vector<4x1xf32>
      tpu.vector_store %arg10[%c0_15, %c0_16], %87 {strides = array<i32>} : memref<4x1xf32, #tpu.memory_space<vmem>>, vector<4x1xf32>,
      %c0_17 = arith.constant 0 : index
      %c0_18 = arith.constant 0 : index
      %89 = vector.load %arg11[%c0_17, %c0_18] : memref<4x1xf32, #tpu.memory_space<vmem>>, vector<4x1xf32>
      %90 = arith.mulf %83, %83 : vector<4x256xf32>
      %cst_19 = arith.constant dense<0.000000e+00> : vector<4xf32>
      %91 = vector.multi_reduction <add>, %90, %cst_19 [1] : vector<4x256xf32> to vector<4xf32>
      %92 = vector.shape_cast %91 : vector<4xf32> to vector<4x1xf32>
      %93 = arith.addf %89, %92 : vector<4x1xf32>
      %c0_20 = arith.constant 0 : index
      %c0_21 = arith.constant 0 : index
      %94 = vector.load %arg11[%c0_20, %c0_21] : memref<4x1xf32, #tpu.memory_space<vmem>>, vector<4x1xf32>
      tpu.vector_store %arg11[%c0_20, %c0_21], %93 {strides = array<i32>} : memref<4x1xf32, #tpu.memory_space<vmem>>, vector<4x1xf32>,
      %c2_i32 = arith.constant 2 : i32
      %95 = arith.muli %arg2, %c2_i32 : i32
      %c0_i32_22 = arith.constant 0 : i32
      %96 = arith.addi %95, %c0_i32_22 : i32
      %97 = arith.index_cast %96 : i32 to index
      %c0_23 = arith.constant 0 : index
      %c0_24 = arith.constant 0 : index
      %98 = vector.load %arg9[%97, %c0_23, %c0_24] : memref<2x4x256xf32, #tpu.memory_space<vmem>>, vector<1x4x256xf32>
      %99 = vector.shape_cast %98 : vector<1x4x256xf32> to vector<4x256xf32>
      %100 = vector.shape_cast %83 : vector<4x256xf32> to vector<1x4x256xf32>
      tpu.vector_store %arg9[%97, %c0_23, %c0_24], %100 {strides = array<i32>} : memref<2x4x256xf32, #tpu.memory_space<vmem>>, vector<1x4x256xf32>,
      %c0_25 = arith.constant 0 : index
      %c0_26 = arith.constant 0 : index
      %c0_27 = arith.constant 0 : index
      %101 = vector.load %arg8[%c0_25, %c0_26, %c0_27] : memref<2x4x256xf32, #tpu.memory_space<vmem>>, vector<1x4x256xf32>
      %102 = vector.shape_cast %101 : vector<1x4x256xf32> to vector<4x256xf32>
      %103 = vector.shape_cast %83 : vector<4x256xf32> to vector<1x4x256xf32>
      tpu.vector_store %arg8[%c0_25, %c0_26, %c0_27], %103 {strides = array<i32>} : memref<2x4x256xf32, #tpu.memory_space<vmem>>, vector<1x4x256xf32>,
      %c1 = arith.constant 1 : index
      %c0_28 = arith.constant 0 : index
      %c0_29 = arith.constant 0 : index
      %104 = vector.load %arg3[%c1, %c0_28, %c0_29] : memref<2x4x256xf32, #tpu.memory_space<vmem>>, vector<1x4x256xf32>
      %105 = vector.shape_cast %104 : vector<1x4x256xf32> to vector<4x256xf32>
      %cst_30 = arith.constant 0.000000e+00 : f32
      %106 = vector.broadcast %cst_30 : f32 to vector<4x256xf32>
      %c17_i32_31 = arith.constant 17 : i32
      %107 = tpu.dynamic_rotate %105 by %c17_i32_31 dim 1 : vector<4x256xf32>, i32 -> vector<4x256xf32>
      %108 = vector.extract_strided_slice %1 {offsets = [0, 0], sizes = [1, 256], strides = [1, 1]} : vector<9x256xf32> to vector<1x256xf32>
      %109 = vector.broadcast %108 : vector<1x256xf32> to vector<4x256xf32>
      %110 = arith.mulf %107, %109 : vector<4x256xf32>
      %111 = vector.extract_strided_slice %0 {offsets = [0, 0], sizes = [4, 1], strides = [1, 1]} : vector<4x9xf32> to vector<4x1xf32>
      %112 = vector.broadcast %111 : vector<4x1xf32> to vector<4x256xf32>
      %113 = arith.mulf %110, %112 : vector<4x256xf32>
      %114 = arith.addf %106, %113 : vector<4x256xf32>
      %c16_i32_32 = arith.constant 16 : i32
      %115 = tpu.dynamic_rotate %105 by %c16_i32_32 dim 1 : vector<4x256xf32>, i32 -> vector<4x256xf32>
      %116 = vector.extract_strided_slice %1 {offsets = [1, 0], sizes = [1, 256], strides = [1, 1]} : vector<9x256xf32> to vector<1x256xf32>
      %117 = vector.broadcast %116 : vector<1x256xf32> to vector<4x256xf32>
      %118 = arith.mulf %115, %117 : vector<4x256xf32>
      %119 = vector.extract_strided_slice %0 {offsets = [0, 1], sizes = [4, 1], strides = [1, 1]} : vector<4x9xf32> to vector<4x1xf32>
      %120 = vector.broadcast %119 : vector<4x1xf32> to vector<4x256xf32>
      %121 = arith.mulf %118, %120 : vector<4x256xf32>
      %122 = arith.addf %114, %121 : vector<4x256xf32>
      %c15_i32_33 = arith.constant 15 : i32
      %123 = tpu.dynamic_rotate %105 by %c15_i32_33 dim 1 : vector<4x256xf32>, i32 -> vector<4x256xf32>
      %124 = vector.extract_strided_slice %1 {offsets = [2, 0], sizes = [1, 256], strides = [1, 1]} : vector<9x256xf32> to vector<1x256xf32>
      %125 = vector.broadcast %124 : vector<1x256xf32> to vector<4x256xf32>
      %126 = arith.mulf %123, %125 : vector<4x256xf32>
      %127 = vector.extract_strided_slice %0 {offsets = [0, 2], sizes = [4, 1], strides = [1, 1]} : vector<4x9xf32> to vector<4x1xf32>
      %128 = vector.broadcast %127 : vector<4x1xf32> to vector<4x256xf32>
      %129 = arith.mulf %126, %128 : vector<4x256xf32>
      %130 = arith.addf %122, %129 : vector<4x256xf32>
      %c1_i32_34 = arith.constant 1 : i32
      %131 = tpu.dynamic_rotate %105 by %c1_i32_34 dim 1 : vector<4x256xf32>, i32 -> vector<4x256xf32>
      %132 = vector.extract_strided_slice %1 {offsets = [3, 0], sizes = [1, 256], strides = [1, 1]} : vector<9x256xf32> to vector<1x256xf32>
      %133 = vector.broadcast %132 : vector<1x256xf32> to vector<4x256xf32>
      %134 = arith.mulf %131, %133 : vector<4x256xf32>
      %135 = vector.extract_strided_slice %0 {offsets = [0, 3], sizes = [4, 1], strides = [1, 1]} : vector<4x9xf32> to vector<4x1xf32>
      %136 = vector.broadcast %135 : vector<4x1xf32> to vector<4x256xf32>
      %137 = arith.mulf %134, %136 : vector<4x256xf32>
      %138 = arith.addf %130, %137 : vector<4x256xf32>
      %139 = vector.extract_strided_slice %0 {offsets = [0, 4], sizes = [4, 1], strides = [1, 1]} : vector<4x9xf32> to vector<4x1xf32>
      %140 = vector.broadcast %139 : vector<4x1xf32> to vector<4x256xf32>
      %141 = arith.mulf %105, %140 : vector<4x256xf32>
      %142 = arith.addf %138, %141 : vector<4x256xf32>
      %c255_i32_35 = arith.constant 255 : i32
      %143 = tpu.dynamic_rotate %105 by %c255_i32_35 dim 1 : vector<4x256xf32>, i32 -> vector<4x256xf32>
      %144 = vector.extract_strided_slice %1 {offsets = [5, 0], sizes = [1, 256], strides = [1, 1]} : vector<9x256xf32> to vector<1x256xf32>
      %145 = vector.broadcast %144 : vector<1x256xf32> to vector<4x256xf32>
      %146 = arith.mulf %143, %145 : vector<4x256xf32>
      %147 = vector.extract_strided_slice %0 {offsets = [0, 5], sizes = [4, 1], strides = [1, 1]} : vector<4x9xf32> to vector<4x1xf32>
      %148 = vector.broadcast %147 : vector<4x1xf32> to vector<4x256xf32>
      %149 = arith.mulf %146, %148 : vector<4x256xf32>
      %150 = arith.addf %142, %149 : vector<4x256xf32>
      %c241_i32_36 = arith.constant 241 : i32
      %151 = tpu.dynamic_rotate %105 by %c241_i32_36 dim 1 : vector<4x256xf32>, i32 -> vector<4x256xf32>
      %152 = vector.extract_strided_slice %1 {offsets = [6, 0], sizes = [1, 256], strides = [1, 1]} : vector<9x256xf32> to vector<1x256xf32>
      %153 = vector.broadcast %152 : vector<1x256xf32> to vector<4x256xf32>
      %154 = arith.mulf %151, %153 : vector<4x256xf32>
      %155 = vector.extract_strided_slice %0 {offsets = [0, 6], sizes = [4, 1], strides = [1, 1]} : vector<4x9xf32> to vector<4x1xf32>
      %156 = vector.broadcast %155 : vector<4x1xf32> to vector<4x256xf32>
      %157 = arith.mulf %154, %156 : vector<4x256xf32>
      %158 = arith.addf %150, %157 : vector<4x256xf32>
      %c240_i32_37 = arith.constant 240 : i32
      %159 = tpu.dynamic_rotate %105 by %c240_i32_37 dim 1 : vector<4x256xf32>, i32 -> vector<4x256xf32>
      %160 = vector.extract_strided_slice %1 {offsets = [7, 0], sizes = [1, 256], strides = [1, 1]} : vector<9x256xf32> to vector<1x256xf32>
      %161 = vector.broadcast %160 : vector<1x256xf32> to vector<4x256xf32>
      %162 = arith.mulf %159, %161 : vector<4x256xf32>
      %163 = vector.extract_strided_slice %0 {offsets = [0, 7], sizes = [4, 1], strides = [1, 1]} : vector<4x9xf32> to vector<4x1xf32>
      %164 = vector.broadcast %163 : vector<4x1xf32> to vector<4x256xf32>
      %165 = arith.mulf %162, %164 : vector<4x256xf32>
      %166 = arith.addf %158, %165 : vector<4x256xf32>
      %c239_i32_38 = arith.constant 239 : i32
      %167 = tpu.dynamic_rotate %105 by %c239_i32_38 dim 1 : vector<4x256xf32>, i32 -> vector<4x256xf32>
      %168 = vector.extract_strided_slice %1 {offsets = [8, 0], sizes = [1, 256], strides = [1, 1]} : vector<9x256xf32> to vector<1x256xf32>
      %169 = vector.broadcast %168 : vector<1x256xf32> to vector<4x256xf32>
      %170 = arith.mulf %167, %169 : vector<4x256xf32>
      %171 = vector.extract_strided_slice %0 {offsets = [0, 8], sizes = [4, 1], strides = [1, 1]} : vector<4x9xf32> to vector<4x1xf32>
      %172 = vector.broadcast %171 : vector<4x1xf32> to vector<4x256xf32>
      %173 = arith.mulf %170, %172 : vector<4x256xf32>
      %174 = arith.addf %166, %173 : vector<4x256xf32>
      %c0_39 = arith.constant 0 : index
      %c0_40 = arith.constant 0 : index
      %175 = vector.load %arg10[%c0_39, %c0_40] : memref<4x1xf32, #tpu.memory_space<vmem>>, vector<4x1xf32>
      %cst_41 = arith.constant dense<0.000000e+00> : vector<4xf32>
      %176 = vector.multi_reduction <add>, %174, %cst_41 [1] : vector<4x256xf32> to vector<4xf32>
      %177 = vector.shape_cast %176 : vector<4xf32> to vector<4x1xf32>
      %178 = arith.addf %175, %177 : vector<4x1xf32>
      %c0_42 = arith.constant 0 : index
      %c0_43 = arith.constant 0 : index
      %179 = vector.load %arg10[%c0_42, %c0_43] : memref<4x1xf32, #tpu.memory_space<vmem>>, vector<4x1xf32>
      tpu.vector_store %arg10[%c0_42, %c0_43], %178 {strides = array<i32>} : memref<4x1xf32, #tpu.memory_space<vmem>>, vector<4x1xf32>,
      %c0_44 = arith.constant 0 : index
      %c0_45 = arith.constant 0 : index
      %180 = vector.load %arg11[%c0_44, %c0_45] : memref<4x1xf32, #tpu.memory_space<vmem>>, vector<4x1xf32>
      %181 = arith.mulf %174, %174 : vector<4x256xf32>
      %cst_46 = arith.constant dense<0.000000e+00> : vector<4xf32>
      %182 = vector.multi_reduction <add>, %181, %cst_46 [1] : vector<4x256xf32> to vector<4xf32>
      %183 = vector.shape_cast %182 : vector<4xf32> to vector<4x1xf32>
      %184 = arith.addf %180, %183 : vector<4x1xf32>
      %c0_47 = arith.constant 0 : index
      %c0_48 = arith.constant 0 : index
      %185 = vector.load %arg11[%c0_47, %c0_48] : memref<4x1xf32, #tpu.memory_space<vmem>>, vector<4x1xf32>
      tpu.vector_store %arg11[%c0_47, %c0_48], %184 {strides = array<i32>} : memref<4x1xf32, #tpu.memory_space<vmem>>, vector<4x1xf32>,
      %c2_i32_49 = arith.constant 2 : i32
      %186 = arith.muli %arg2, %c2_i32_49 : i32
      %c1_i32_50 = arith.constant 1 : i32
      %187 = arith.addi %186, %c1_i32_50 : i32
      %188 = arith.index_cast %187 : i32 to index
      %c0_51 = arith.constant 0 : index
      %c0_52 = arith.constant 0 : index
      %189 = vector.load %arg9[%188, %c0_51, %c0_52] : memref<2x4x256xf32, #tpu.memory_space<vmem>>, vector<1x4x256xf32>
      %190 = vector.shape_cast %189 : vector<1x4x256xf32> to vector<4x256xf32>
      %191 = vector.shape_cast %174 : vector<4x256xf32> to vector<1x4x256xf32>
      tpu.vector_store %arg9[%188, %c0_51, %c0_52], %191 {strides = array<i32>} : memref<2x4x256xf32, #tpu.memory_space<vmem>>, vector<1x4x256xf32>,
      %c1_53 = arith.constant 1 : index
      %c0_54 = arith.constant 0 : index
      %c0_55 = arith.constant 0 : index
      %192 = vector.load %arg8[%c1_53, %c0_54, %c0_55] : memref<2x4x256xf32, #tpu.memory_space<vmem>>, vector<1x4x256xf32>
      %193 = vector.shape_cast %192 : vector<1x4x256xf32> to vector<4x256xf32>
      %194 = vector.shape_cast %174 : vector<4x256xf32> to vector<1x4x256xf32>
      tpu.vector_store %arg8[%c1_53, %c0_54, %c0_55], %194 {strides = array<i32>} : memref<2x4x256xf32, #tpu.memory_space<vmem>>, vector<1x4x256xf32>,
    } else {
    }
    %c1_i32 = arith.constant 1 : i32
    %10 = arith.cmpi eq, %arg1, %c1_i32 : i32
    %11 = arith.extui %10 : i1 to i32
    %c0_i32_7 = arith.constant 0 : i32
    %12 = arith.cmpi ne, %11, %c0_i32_7 : i32
    scf.if %12 {
      %c0_8 = arith.constant 0 : index
      %c0_9 = arith.constant 0 : index
      %13 = vector.load %arg10[%c0_8, %c0_9] : memref<4x1xf32, #tpu.memory_space<vmem>>, vector<4x1xf32>
      %cst = arith.constant 0.001953125 : f32
      %14 = vector.broadcast %cst : f32 to vector<4x1xf32>
      %15 = arith.mulf %13, %14 : vector<4x1xf32>
      %c0_10 = arith.constant 0 : index
      %c0_11 = arith.constant 0 : index
      %16 = vector.load %arg11[%c0_10, %c0_11] : memref<4x1xf32, #tpu.memory_space<vmem>>, vector<4x1xf32>
      %cst_12 = arith.constant 0.001953125 : f32
      %17 = vector.broadcast %cst_12 : f32 to vector<4x1xf32>
      %18 = arith.mulf %16, %17 : vector<4x1xf32>
      %19 = arith.mulf %15, %15 : vector<4x1xf32>
      %20 = arith.subf %18, %19 : vector<4x1xf32>
      %cst_13 = arith.constant 0.000000e+00 : f32
      %21 = vector.broadcast %cst_13 : f32 to vector<4x1xf32>
      %22 = arith.maximumf %20, %21 : vector<4x1xf32>
      %c0_14 = arith.constant 0 : index
      %c0_15 = arith.constant 0 : index
      %23 = vector.load %arg6[%c0_14, %c0_15] : memref<4x1xf32, #tpu.memory_space<vmem>>, vector<4x1xf32>
      %cst_16 = arith.constant 9.99999974E-6 : f32
      %24 = vector.broadcast %cst_16 : f32 to vector<4x1xf32>
      %25 = arith.addf %22, %24 : vector<4x1xf32>
      %26 = math.rsqrt %25 : vector<4x1xf32>
      %27 = arith.mulf %23, %26 : vector<4x1xf32>
      %c0_17 = arith.constant 0 : index
      %c0_18 = arith.constant 0 : index
      %28 = vector.load %arg7[%c0_17, %c0_18] : memref<4x1xf32, #tpu.memory_space<vmem>>, vector<4x1xf32>
      %29 = arith.mulf %15, %27 : vector<4x1xf32>
      %30 = arith.subf %28, %29 : vector<4x1xf32>
      %c2_i32 = arith.constant 2 : i32
      %31 = arith.muli %arg2, %c2_i32 : i32
      %c0_i32_19 = arith.constant 0 : i32
      %32 = arith.addi %31, %c0_i32_19 : i32
      %33 = arith.index_cast %32 : i32 to index
      %c0_20 = arith.constant 0 : index
      %c0_21 = arith.constant 0 : index
      %34 = vector.load %arg9[%33, %c0_20, %c0_21] : memref<2x4x256xf32, #tpu.memory_space<vmem>>, vector<1x4x256xf32>
      %35 = vector.shape_cast %34 : vector<1x4x256xf32> to vector<4x256xf32>
      %36 = vector.broadcast %27 : vector<4x1xf32> to vector<4x256xf32>
      %37 = arith.mulf %35, %36 : vector<4x256xf32>
      %38 = vector.broadcast %30 : vector<4x1xf32> to vector<4x256xf32>
      %39 = arith.addf %37, %38 : vector<4x256xf32>
      %c0_22 = arith.constant 0 : index
      %c0_23 = arith.constant 0 : index
      %c0_24 = arith.constant 0 : index
      %40 = vector.load %arg8[%c0_22, %c0_23, %c0_24] : memref<2x4x256xf32, #tpu.memory_space<vmem>>, vector<1x4x256xf32>
      %41 = vector.shape_cast %40 : vector<1x4x256xf32> to vector<4x256xf32>
      %42 = vector.shape_cast %39 : vector<4x256xf32> to vector<1x4x256xf32>
      tpu.vector_store %arg8[%c0_22, %c0_23, %c0_24], %42 {strides = array<i32>} : memref<2x4x256xf32, #tpu.memory_space<vmem>>, vector<1x4x256xf32>,
      %c2_i32_25 = arith.constant 2 : i32
      %43 = arith.muli %arg2, %c2_i32_25 : i32
      %c1_i32_26 = arith.constant 1 : i32
      %44 = arith.addi %43, %c1_i32_26 : i32
      %45 = arith.index_cast %44 : i32 to index
      %c0_27 = arith.constant 0 : index
      %c0_28 = arith.constant 0 : index
      %46 = vector.load %arg9[%45, %c0_27, %c0_28] : memref<2x4x256xf32, #tpu.memory_space<vmem>>, vector<1x4x256xf32>
      %47 = vector.shape_cast %46 : vector<1x4x256xf32> to vector<4x256xf32>
      %48 = vector.broadcast %27 : vector<4x1xf32> to vector<4x256xf32>
      %49 = arith.mulf %47, %48 : vector<4x256xf32>
      %50 = vector.broadcast %30 : vector<4x1xf32> to vector<4x256xf32>
      %51 = arith.addf %49, %50 : vector<4x256xf32>
      %c1 = arith.constant 1 : index
      %c0_29 = arith.constant 0 : index
      %c0_30 = arith.constant 0 : index
      %52 = vector.load %arg8[%c1, %c0_29, %c0_30] : memref<2x4x256xf32, #tpu.memory_space<vmem>>, vector<1x4x256xf32>
      %53 = vector.shape_cast %52 : vector<1x4x256xf32> to vector<4x256xf32>
      %54 = vector.shape_cast %51 : vector<4x256xf32> to vector<1x4x256xf32>
      tpu.vector_store %arg8[%c1, %c0_29, %c0_30], %54 {strides = array<i32>} : memref<2x4x256xf32, #tpu.memory_space<vmem>>, vector<1x4x256xf32>,
    } else {
    }
    return
  }
  func.func @transform_0(%arg0: i32, %arg1: i32, %arg2: i32) -> (i32, i32, i32) {
    %c1_i32 = arith.constant 1 : i32
    %0 = arith.subi %c1_i32, %arg1 : i32
    %1 = arith.muli %arg2, %0 : i32
    %c0_i32 = arith.constant 0 : i32
    %2 = arith.muli %c0_i32, %arg1 : i32
    %3 = arith.addi %1, %2 : i32
    %c0_i32_0 = arith.constant 0 : i32
    %c0_i32_1 = arith.constant 0 : i32
    return %3, %arg0, %c0_i32_0 : i32, i32, i32
  }
  func.func @transform_1(%arg0: i32, %arg1: i32, %arg2: i32) -> (i32, i32) {
    %c0_i32 = arith.constant 0 : i32
    %c0_i32_0 = arith.constant 0 : i32
    return %arg0, %c0_i32 : i32, i32
  }
  func.func @transform_2(%arg0: i32, %arg1: i32, %arg2: i32) -> (i32, i32) {
    %c0_i32 = arith.constant 0 : i32
    %c0_i32_0 = arith.constant 0 : i32
    %c0_i32_1 = arith.constant 0 : i32
    return %c0_i32, %c0_i32_0 : i32, i32
  }
  func.func @transform_3(%arg0: i32, %arg1: i32, %arg2: i32) -> (i32, i32) {
    %c0_i32 = arith.constant 0 : i32
    %c0_i32_0 = arith.constant 0 : i32
    return %arg0, %c0_i32 : i32, i32
  }
  func.func @transform_4(%arg0: i32, %arg1: i32, %arg2: i32) -> (i32, i32) {
    %c0_i32 = arith.constant 0 : i32
    %c0_i32_0 = arith.constant 0 : i32
    return %arg0, %c0_i32 : i32, i32
  }
  func.func @transform_5(%arg0: i32, %arg1: i32, %arg2: i32) -> (i32, i32, i32) {
    %0 = arith.muli %arg2, %arg1 : i32
    %c0_i32 = arith.constant 0 : i32
    %c0_i32_0 = arith.constant 0 : i32
    return %0, %arg0, %c0_i32 : i32, i32, i32
  }
}

</mosaic_0001>

<llo_original>
// kernel: tpu_custom_call.1
$region0: #{tpu_custom_call.1}
  #allocation0 [shape = 'u32[]', space=smem, size = 0x4, offset = 0x4, fixed_abs, tag = 'smem constant byte address 0x4 - core index']
  #allocation1 [shape = 'u32[72,128]{1,0:T(1,128)}', space=vmem, size = 0x9000, scoped, tag = 'internal scratch']
  #allocation2 [shape = 'f32[2,4,256]{2,1,0:T(4,128)}', space=vmem, size = 0x2000, scoped, tag = 'scratch operand']
  #allocation3 [shape = 'f32[4,1]{1,0:T(4,128)}', space=vmem, size = 0x800, scoped, tag = 'scratch operand']
  #allocation4 [shape = 'f32[4,1]{1,0:T(4,128)}', space=vmem, size = 0x800, scoped, tag = 'scratch operand']
  %s0 = inlined_call_operand.hbm [shape: f32[2,4,256], index: 0, kind: input, shape index: {}]
  %s1 = inlined_call_operand.vmem [shape: f32[4,9], index: 1, kind: input, shape index: {}]
  %s2 = inlined_call_operand.hbm [shape: f32[9,256], index: 2, kind: input, shape index: {}]
  %s3 = inlined_call_operand.vmem [shape: f32[4,1], index: 3, kind: input, shape index: {}]
  %s4 = inlined_call_operand.vmem [shape: f32[4,1], index: 4, kind: input, shape index: {}]
  %s5 = inlined_call_operand.hbm [shape: f32[2,4,256], index: 5, kind: output, shape index: {}]
  %s6 = sld [smem:[#allocation0]]
  $region73: #{tpu_custom_call.1} parent=0
    _
  %s8 = ssub.s32 1, %s6
  %s9 = scalar_select 0, %s8, %s6
  $region1: #{tpu_custom_call.1} parent=0
    #allocation5 [shape = 'u8[16384]{0}', space=vmem, size = 0x4000, scoped, tag = 'input window, operand 0']
    #allocation6 [shape = 's32[2]{0}', space=sflag, size = 0x8, scoped, tag = 'scoped memory for tpu_custom_call.1']
    #allocation7 [shape = 's32[2]{0}', space=sflag, size = 0x8, scoped, tag = 'scoped memory for tpu_custom_call.1']
    #allocation8 [shape = 'u8[16384]{0}', space=vmem, size = 0x4000, scoped, tag = 'input window, operand 2, single buffered']
    #allocation9 [shape = 's32[1]{0}', space=sflag, size = 0x4, scoped, tag = 'scoped memory for tpu_custom_call.1']
    #allocation10 [shape = 'u8[16384]{0}', space=vmem, size = 0x4000, scoped, tag = 'output window, operand 0']
    %10 = vsyncpa [#allocation6], 0
    %s11 = scalar_lea.sflag [#allocation6], 1
    %12 = vsyncpa %s11, 0
    %13 = vsyncpa [#allocation9], 0
    %14 = vsyncpa [#allocation7], 0
    %s15 = scalar_lea.sflag [#allocation7], 1
    %16 = vsyncpa %s15, 0
    loop: start=0, step=1, limit=4
    $region2: #{tpu_custom_call.1} parent=1 // loop_pre_header
      _
    $region3: #{tpu_custom_call.1} parent=1 // loop_header
      %s18 = sphi 0, %s22
      %p19 = scmp.ge.s32.totalorder %s18, 4
      %s25 = sphi 0, %s44
      %s26 = sphi 0, %s40
      %s27 = sphi 0, %s36
      %s28 = sphi 0, %s25
      %s29 = sphi 0, %s26
      %s30 = sphi 0, %s27
      %s31 = sphi 0, %s28
      %s32 = sphi 0, %s29
      %s33 = sphi 0, %s30
      %s53 = sphi 0, %s55
      %s56 = sphi 0, %s53
      %s57 = sphi 0, %s56
      %s73 = sphi 0, %s57
      %s79 = sphi 0, %s81
      %s82 = sphi 0, %s79
      %s83 = sphi 0, %s82
      %s99 = sphi 0, %s83
      %s103 = sphi 0, %s103
      %s105 = sphi 0, %s103
      %s106 = sphi 0, %s105
      %s120 = sphi 0, %s106
      %s126 = sphi 0, %s128
      %s129 = sphi 0, %s126
      %s130 = sphi 0, %s129
      %s146 = sphi 0, %s130
      %s152 = sphi 0, %s154
      %s155 = sphi 0, %s152
      %s156 = sphi 0, %s155
      %s172 = sphi 0, %s156
      %s182 = sphi 0, %s184
      %s185 = sphi 0, %s182
      %s186 = sphi 0, %s185
      %s202 = sphi 0, %s186
    $region4: #{tpu_custom_call.1} parent=1 // loop_header_branch
      %21 = sbr.rel (%p19) target = $region8
    $region5: #{tpu_custom_call.1} parent=1 // loop_body
      %s23 = ssub.s32 %s18, 1
      %s24 = ssub.s32 %s18, 2
      %s34 = sadd.s32 1, %s27
      %p35 = scmp.ge.s32.totalorder %s34, 1
      %s36 = scalar_select %p35, 0, %s34
      %s37 = sadd.s32 1, %s26
      %s38 = scalar_select %p35, %s37, %s26
      %p39 = scmp.ge.s32.totalorder %s38, 2
      %s40 = scalar_select %p39, 0, %s38
      %s41 = sadd.s32 1, %s25
      %s42 = scalar_select %p39, %s41, %s25
      %p43 = scmp.ge.s32.totalorder %s42, 1
      %s44 = scalar_select %p43, 0, %s42
      %s45 = ssub.s32 1, %s26
      %s46 = smul.u32 %s27, %s45
      %s47 = ssub.s32 1, %s40
      %s48 = smul.u32 %s36, %s47
      %s49 = ssub.s32 %s46, %s48
      %s50 = ssub.s32 %s25, %s44
      %s51 = sor.u32 %s49, %s50
      %p52 = scmp.eq.s32.totalorder %s51, 0
      %s54 = sadd.s32 %s53, 1
      %s55 = scalar_select %p52, %s53, %s54
      %p58 = pneg %p52
      %p59 = scmp.eq.s32.totalorder %s18, 1
      %p60 = por %p58, %p59
      %p61 = scmp.ne.s32.totalorder %s53, %s56
      %p62 = scmp.eq.s32.totalorder %s18, 0
      %p63 = por %p61, %p62
      %p64 = scmp.ne.s32.totalorder %s53, %s56
      %p65 = scmp.eq.s32.totalorder %s23, 1
      %p66 = por %p64, %p65
      %p67 = scmp.ne.s32.totalorder %s56, %s57
      %p68 = scmp.eq.s32.totalorder %s23, 0
      %p69 = por %p67, %p68
      %p70 = scmp.ne.s32.totalorder %s56, %s57
      %p71 = scmp.eq.s32.totalorder %s24, 1
      %p72 = por %p70, %p71
      %p74 = scmp.ne.s32.totalorder %s57, %s73
      %p75 = scmp.eq.s32.totalorder %s24, 0
      %p76 = por %p74, %p75
      %s77 = ssub.s32 %s25, %s44
      %p78 = scmp.eq.s32.totalorder %s77, 0
      %s80 = sadd.s32 %s79, 1
      %s81 = scalar_select %p78, %s79, %s80
      %p84 = pneg %p78
      %p85 = scmp.eq.s32.totalorder %s18, 1
      %p86 = por %p84, %p85
      %p87 = scmp.ne.s32.totalorder %s79, %s82
      %p88 = scmp.eq.s32.totalorder %s18, 0
      %p89 = por %p87, %p88
      %p90 = scmp.ne.s32.totalorder %s79, %s82
      %p91 = scmp.eq.s32.totalorder %s23, 1
      %p92 = por %p90, %p91
      %p93 = scmp.ne.s32.totalorder %s82, %s83
      %p94 = scmp.eq.s32.totalorder %s23, 0
      %p95 = por %p93, %p94
      %p96 = scmp.ne.s32.totalorder %s82, %s83
      %p97 = scmp.eq.s32.totalorder %s24, 1
      %p98 = por %p96, %p97
      %p100 = scmp.ne.s32.totalorder %s83, %s99
      %p101 = scmp.eq.s32.totalorder %s24, 0
      %p102 = por %p100, %p101
      %s104 = sadd.s32 %s103, 1
      %p107 = scmp.eq.s32.totalorder %s18, 1
      %p108 = scmp.ne.s32.totalorder %s103, %s105
      %p109 = scmp.eq.s32.totalorder %s18, 0
      %p110 = por %p108, %p109
      %p111 = scmp.ne.s32.totalorder %s103, %s105
      %p112 = scmp.eq.s32.totalorder %s23, 1
      %p113 = por %p111, %p112
      %p114 = scmp.ne.s32.totalorder %s105, %s106
      %p115 = scmp.eq.s32.totalorder %s23, 0
      %p116 = por %p114, %p115
      %p117 = scmp.ne.s32.totalorder %s105, %s106
      %p118 = scmp.eq.s32.totalorder %s24, 1
      %p119 = por %p117, %p118
      %p121 = scmp.ne.s32.totalorder %s106, %s120
      %p122 = scmp.eq.s32.totalorder %s24, 0
      %p123 = por %p121, %p122
      %s124 = ssub.s32 %s25, %s44
      %p125 = scmp.eq.s32.totalorder %s124, 0
      %s127 = sadd.s32 %s126, 1
      %s128 = scalar_select %p125, %s126, %s127
      %p131 = pneg %p125
      %p132 = scmp.eq.s32.totalorder %s18, 1
      %p133 = por %p131, %p132
      %p134 = scmp.ne.s32.totalorder %s126, %s129
      %p135 = scmp.eq.s32.totalorder %s18, 0
      %p136 = por %p134, %p135
      %p137 = scmp.ne.s32.totalorder %s126, %s129
      %p138 = scmp.eq.s32.totalorder %s23, 1
      %p139 = por %p137, %p138
      %p140 = scmp.ne.s32.totalorder %s129, %s130
      %p141 = scmp.eq.s32.totalorder %s23, 0
      %p142 = por %p140, %p141
      %p143 = scmp.ne.s32.totalorder %s129, %s130
      %p144 = scmp.eq.s32.totalorder %s24, 1
      %p145 = por %p143, %p144
      %p147 = scmp.ne.s32.totalorder %s130, %s146
      %p148 = scmp.eq.s32.totalorder %s24, 0
      %p149 = por %p147, %p148
      %s150 = ssub.s32 %s25, %s44
      %p151 = scmp.eq.s32.totalorder %s150, 0
      %s153 = sadd.s32 %s152, 1
      %s154 = scalar_select %p151, %s152, %s153
      %p157 = pneg %p151
      %p158 = scmp.eq.s32.totalorder %s18, 1
      %p159 = por %p157, %p158
      %p160 = scmp.ne.s32.totalorder %s152, %s155
      %p161 = scmp.eq.s32.totalorder %s18, 0
      %p162 = por %p160, %p161
      %p163 = scmp.ne.s32.totalorder %s152, %s155
      %p164 = scmp.eq.s32.totalorder %s23, 1
      %p165 = por %p163, %p164
      %p166 = scmp.ne.s32.totalorder %s155, %s156
      %p167 = scmp.eq.s32.totalorder %s23, 0
      %p168 = por %p166, %p167
      %p169 = scmp.ne.s32.totalorder %s155, %s156
      %p170 = scmp.eq.s32.totalorder %s24, 1
      %p171 = por %p169, %p170
      %p173 = scmp.ne.s32.totalorder %s156, %s172
      %p174 = scmp.eq.s32.totalorder %s24, 0
      %p175 = por %p173, %p174
      %s176 = smul.u32 %s27, %s26
      %s177 = smul.u32 %s36, %s40
      %s178 = ssub.s32 %s176, %s177
      %s179 = ssub.s32 %s25, %s44
      %s180 = sor.u32 %s178, %s179
      %p181 = scmp.eq.s32.totalorder %s180, 0
      %s183 = sadd.s32 %s182, 1
      %s184 = scalar_select %p181, %s182, %s183
      %p187 = pneg %p181
      %p188 = scmp.eq.s32.totalorder %s18, 1
      %p189 = por %p187, %p188
      %p190 = scmp.ne.s32.totalorder %s182, %s185
      %p191 = scmp.eq.s32.totalorder %s18, 0
      %p192 = por %p190, %p191
      %p193 = scmp.ne.s32.totalorder %s182, %s185
      %p194 = scmp.eq.s32.totalorder %s23, 1
      %p195 = por %p193, %p194
      %p196 = scmp.ne.s32.totalorder %s185, %s186
      %p197 = scmp.eq.s32.totalorder %s23, 0
      %p198 = por %p196, %p197
      %p199 = scmp.ne.s32.totalorder %s185, %s186
      %p200 = scmp.eq.s32.totalorder %s24, 1
      %p201 = por %p199, %p200
      %p203 = scmp.ne.s32.totalorder %s186, %s202
      %p204 = scmp.eq.s32.totalorder %s24, 0
      %p205 = por %p203, %p204
      %p206 = scmp.le.s32.totalorder 1, %s18
      %p207 = scmp.lt.s32.totalorder %s18, 3
      %p208 = pnand %p206, %p207
      %p209 = pneg %p208
      // Predicated region
      $region9: #{tpu_custom_call.1} parent=5 // pred_check
        _
      $region10: #{tpu_custom_call.1} parent=5 // pred_check_branch
        %211 = sbr.rel (%p208) target = $region12
      $region11: #{tpu_custom_call.1} parent=5 // pred_region
        %s212 = ssub.s32 %s18, 1
        // Predicated region
        $region13: #{tpu_custom_call.1} parent=11 // pred_check
          %p213 = pneg %p95
        $region14: #{tpu_custom_call.1} parent=11 // pred_check_branch
          %215 = sbr.rel (%p213) target = $region16
        $region15: #{tpu_custom_call.1} parent=11 // pred_region
          %p216 = scmp.lt.s32.totalorder %s28, 0
          %s217 = scalar_select %p216, %s28, 0
          %s218 = smul.addr %s217, 4
          %s219 = scalar_lea.vmem %s1, %s218
        $region16: #{tpu_custom_call.1} parent=11 // pred_fallthru
          _
        // Predicated region
        $region17: #{tpu_custom_call.1} parent=11 // pred_check
          %p220 = pneg %p116
        $region18: #{tpu_custom_call.1} parent=11 // pred_check_branch
          %222 = sbr.rel (%p220) target = $region20
        $region19: #{tpu_custom_call.1} parent=11 // pred_region
          %224 = vsyncadd [#allocation9], 0
          %s225 = sshll.u32 %s2, 4
          %s226 = int_to_ptr.hbm [resolvable:$true] %s225
          %s227 = sshll.u32 [#allocation8], 4
          %s228 = int_to_ptr.vmem [resolvable:$true] %s227
          %233 = dma.hbm_to_vmem [thread:$0]  %s226, 512, %s228, [#allocation9], 256, 256, 16
        $region20: #{tpu_custom_call.1} parent=11 // pred_fallthru
          _
        // Predicated region
        $region21: #{tpu_custom_call.1} parent=11 // pred_check
          %p234 = pneg %p142
        $region22: #{tpu_custom_call.1} parent=11 // pred_check_branch
          %236 = sbr.rel (%p234) target = $region24
        $region23: #{tpu_custom_call.1} parent=11 // pred_region
          %p237 = scmp.lt.s32.totalorder %s28, 0
          %s238 = scalar_select %p237, %s28, 0
          %s239 = smul.addr %s238, 4
          %s240 = scalar_lea.vmem %s3, %s239
        $region24: #{tpu_custom_call.1} parent=11 // pred_fallthru
          _
        // Predicated region
        $region25: #{tpu_custom_call.1} parent=11 // pred_check
          %p241 = pneg %p168
        $region26: #{tpu_custom_call.1} parent=11 // pred_check_branch
          %243 = sbr.rel (%p241) target = $region28
        $region27: #{tpu_custom_call.1} parent=11 // pred_region
          %p244 = scmp.lt.s32.totalorder %s28, 0
          %s245 = scalar_select %p244, %s28, 0
          %s246 = smul.addr %s245, 4
          %s247 = scalar_lea.vmem %s4, %s246
        $region28: #{tpu_custom_call.1} parent=11 // pred_fallthru
          _
      $region12: #{tpu_custom_call.1} parent=5 // pred_fallthru
        _
      %p248 = scmp.lt.s32.totalorder %s18, 2
      // Predicated region
      $region29: #{tpu_custom_call.1} parent=5 // pred_check
        %p249 = pneg %p248
      $region30: #{tpu_custom_call.1} parent=5 // pred_check_branch
        %251 = sbr.rel (%p249) target = $region32
      $region31: #{tpu_custom_call.1} parent=5 // pred_region
        // Predicated region
        $region33: #{tpu_custom_call.1} parent=31 // pred_check
          %p252 = pneg %p63
        $region34: #{tpu_custom_call.1} parent=31 // pred_check_branch
          %254 = sbr.rel (%p252) target = $region36
        $region35: #{tpu_custom_call.1} parent=31 // pred_region
          %s255 = sand.u32 %s53, 1
          %s256 = scalar_lea.sflag [#allocation6], %s255
          %s257 = sand.u32 %s53, 1
          %s258 = smul.addr %s257, 16
          %s259 = scalar_lea.vmem [#allocation5], %s258
          %s260 = ssub.s32 1, %s26
          %s261 = smul.u32 %s27, %s260
          %s262 = smul.u32 2, %s261
          %264 = vsyncadd %s256, 0
          %s265 = smul.addr %s25, 2
          %s266 = smul.addr %s262, 2
          %s267 = sadd.s32 %s265, %s266
          %s268 = smul.addr %s267, 4
          %s269 = scalar_lea.hbm %s0, %s268
          %s270 = sshll.u32 %s269, 4
          %s271 = int_to_ptr.hbm [resolvable:$true] %s270
          %s272 = sshll.u32 %s259, 4
          %s273 = int_to_ptr.vmem [resolvable:$true] %s272
          %278 = dma.hbm_to_vmem [thread:$0]  %s271, 256, %s273, %s256, 128, 128, 8
        $region36: #{tpu_custom_call.1} parent=31 // pred_fallthru
          _
      $region32: #{tpu_custom_call.1} parent=5 // pred_fallthru
        _
      %p279 = scmp.le.s32.totalorder 1, %s18
      %p280 = scmp.lt.s32.totalorder %s18, 3
      %p281 = pnand %p279, %p280
      %p282 = pneg %p281
      // Predicated region
      $region37: #{tpu_custom_call.1} parent=5 // pred_check
        _
      $region38: #{tpu_custom_call.1} parent=5 // pred_check_branch
        %284 = sbr.rel (%p281) target = $region40
      $region39: #{tpu_custom_call.1} parent=5 // pred_region
        %s285 = ssub.s32 %s18, 1
        %s286 = sand.u32 %s56, 1
        %s287 = scalar_lea.sflag [#allocation6], %s286
        %s288 = sand.u32 %s56, 1
        %s289 = smul.addr %s288, 16
        %s290 = scalar_lea.vmem [#allocation5], %s289
        // Predicated region
        $region41: #{tpu_custom_call.1} parent=39 // pred_check
          %p291 = pneg %p69
        $region42: #{tpu_custom_call.1} parent=39 // pred_check_branch
          %293 = sbr.rel (%p291) target = $region44
        $region43: #{tpu_custom_call.1} parent=39 // pred_region
          %295 = dma.done %s287, 256
        $region44: #{tpu_custom_call.1} parent=39 // pred_fallthru
          _
        // Predicated region
        $region45: #{tpu_custom_call.1} parent=39 // pred_check
          %p296 = pneg %p116
        $region46: #{tpu_custom_call.1} parent=39 // pred_check_branch
          %298 = sbr.rel (%p296) target = $region48
        $region47: #{tpu_custom_call.1} parent=39 // pred_region
          %300 = dma.done [#allocation9], 512
        $region48: #{tpu_custom_call.1} parent=39 // pred_fallthru
          _
        %s301 = sand.u32 %s56, 1
        %s302 = scalar_lea.sflag [#allocation6], %s301
        %s303 = sand.u32 %s56, 1
        %s304 = smul.addr %s303, 16
        %s305 = scalar_lea.vmem [#allocation5], %s304
        %p306 = pneg %p69
        %p307 = pneg %p66
        %p308 = scmp.lt.s32.totalorder %s28, 0
        %s309 = scalar_select %p308, %s28, 0
        %s310 = smul.addr %s309, 4
        %s311 = scalar_lea.vmem %s1, %s310
        %p312 = pneg %p95
        %p313 = pneg %p92
        %p314 = pneg %p116
        %p315 = pneg %p113
        %p316 = scmp.lt.s32.totalorder %s28, 0
        %s317 = scalar_select %p316, %s28, 0
        %s318 = smul.addr %s317, 4
        %s319 = scalar_lea.vmem %s3, %s318
        %p320 = pneg %p142
        %p321 = pneg %p139
        %p322 = scmp.lt.s32.totalorder %s28, 0
        %s323 = scalar_select %p322, %s28, 0
        %s324 = smul.addr %s323, 4
        %s325 = scalar_lea.vmem %s4, %s324
        %p326 = pneg %p168
        %p327 = pneg %p165
        %p328 = pneg %p198
        %p329 = pneg %p195
        %s330 = sand.u32 %s185, 1
        %s331 = scalar_lea.sflag [#allocation7], %s330
        %s332 = sand.u32 %s185, 1
        %s333 = smul.addr %s332, 16
        %s334 = scalar_lea.vmem [#allocation10], %s333
        %s335 = ssub.s32 1, %s29
        %s336 = smul.u32 %s30, %s335
        %s337 = smul.u32 2, %s336
        %p338 = scmp.lt.s32.totalorder %s28, 0
        %s339 = scalar_select %p338, %s28, 0
        %s340 = smul.addr %s339, 4
        %s341 = scalar_lea.vmem %s1, %s340
        %p342 = scmp.lt.s32.totalorder %s28, 0
        %s343 = scalar_select %p342, %s28, 0
        %s344 = smul.addr %s343, 4
        %s345 = scalar_lea.vmem %s3, %s344
        %p346 = scmp.lt.s32.totalorder %s28, 0
        %s347 = scalar_select %p346, %s28, 0
        %s348 = smul.addr %s347, 4
        %s349 = scalar_lea.vmem %s4, %s348
        %s350 = smul.u32 %s30, %s29
        %s351 = smul.u32 2, %s350
        %v352 = vld [vmem:[%s341] sm:$0xf]
        %v353 = vld [vmem:[#allocation8] sm:$0xff]
        %v354 = vld [vmem:[#allocation8 + $0x8] sm:$0xff]
        %v355 = vld [vmem:[#allocation8 + $0x10] sm:$0x1]
        %v356 = vld [vmem:[#allocation8 + $0x18] sm:$0x1]
        %p357 = scmp.eq.s32.totalorder %s29, 0
        %p358 = scmp.eq.s32.totalorder %s30, 0
        %p359 = pnand %p357, %p358
        %p360 = pneg %p359
        // Predicated region
        $region49: #{tpu_custom_call.1} parent=39 // pred_check
          _
        $region50: #{tpu_custom_call.1} parent=39 // pred_check_branch
          %362 = sbr.rel (%p359) target = $region52
        $region51: #{tpu_custom_call.1} parent=39 // pred_region
          %vm363 = vcmask 3072
          %364 = vst.msk [vmem:[#allocation3] sm:$0xf] %vm363, 0.0
          %365 = vst.msk [vmem:[#allocation4] sm:$0xf] %vm363, 0.0
        $region52: #{tpu_custom_call.1} parent=39 // pred_fallthru
          _
        // Predicated region
        $region53: #{tpu_custom_call.1} parent=39 // pred_check
          %p366 = pneg %p357
        $region54: #{tpu_custom_call.1} parent=39 // pred_check_branch
          %368 = sbr.rel (%p366) target = $region56
        $region55: #{tpu_custom_call.1} parent=39 // pred_region
          %v369 = vld [vmem:[%s290] sm:$0xff]
          %371 = vst [vmem:[#allocation1] ss:$2 sm:$0xff] %v369
          %v372 = vld.sshfl [vmem:[#allocation1] sm:$0xff pattern:$0x75316420]
          %v373 = vld.sshfl [vmem:[#allocation1 + $0x8] sm:$0xff pattern:$0x75316420]
          %376 = vrot.lane.b32.xlu0 %v372, 17
          %v377 = vpop.permute.xlu0 %376
          %378 = vrot.lane.b32.xlu0 %v373, 17
          %v379 = vpop.permute.xlu0 %378
          %v380 = vlaneseq
          %v381 = vand.u32 %v380, 127
          %vm382 = vcmp.lt.s32.totalorder %v381, 17
          %v383 = vsel %vm382, %v377, %v379
          %v384 = vsel %vm382, %v379, %v377
          %v385 = vperm.slane %v353, 0
          %v386 = vperm.slane %v354, 0
          %v387 = vmul.f32 %v384, %v385
          %v388 = vmul.f32 %v383, %v386
          %390 = vset.pattern.permute.xlu0 0
          %391 = vperm.xlu0 %390, %v352
          %v392 = vpop.permute.xlu0 %391
          %v394 = vmul.f32 %v387, %v392
          %v395 = vmul.f32 %v388, %v392
          %v396 = vadd.f32 %v394, 0.0
          %v397 = vadd.f32 %v395, 0.0
          %398 = vst [vmem:[#allocation1] ss:$2 sm:$0xff] %v369
          %v399 = vld.sshfl [vmem:[#allocation1] sm:$0xff pattern:$0x75316420]
          %v400 = vld.sshfl [vmem:[#allocation1 + $0x8] sm:$0xff pattern:$0x75316420]
          %403 = vrot.lane.b32.xlu0 %v399, 16
          %v404 = vpop.permute.xlu0 %403
          %405 = vrot.lane.b32.xlu0 %v400, 16
          %v406 = vpop.permute.xlu0 %405
          %vm407 = vcmp.lt.s32.totalorder %v381, 16
          %v408 = vsel %vm407, %v404, %v406
          %v409 = vsel %vm407, %v406, %v404
          %v410 = vperm.slane %v353, 1
          %v411 = vperm.slane %v354, 1
          %v412 = vmul.f32 %v409, %v410
          %v413 = vmul.f32 %v408, %v411
          %414 = vset.pattern.permute.xlu0 1
          %415 = vperm.xlu0 %414, %v352
          %v416 = vpop.permute.xlu0 %415
          %v418 = vmul.f32 %v412, %v416
          %v419 = vmul.f32 %v413, %v416
          %v420 = vadd.f32 %v396, %v418
          %v421 = vadd.f32 %v397, %v419
          %422 = vst [vmem:[#allocation1] ss:$2 sm:$0xff] %v369
          %v423 = vld.sshfl [vmem:[#allocation1] sm:$0xff pattern:$0x75316420]
          %v424 = vld.sshfl [vmem:[#allocation1 + $0x8] sm:$0xff pattern:$0x75316420]
          %427 = vrot.lane.b32.xlu0 %v423, 15
          %v428 = vpop.permute.xlu0 %427
          %429 = vrot.lane.b32.xlu0 %v424, 15
          %v430 = vpop.permute.xlu0 %429
          %vm431 = vcmp.lt.s32.totalorder %v381, 15
          %v432 = vsel %vm431, %v428, %v430
          %v433 = vsel %vm431, %v430, %v428
          %v434 = vperm.slane %v353, 2
          %v435 = vperm.slane %v354, 2
          %v436 = vmul.f32 %v433, %v434
          %v437 = vmul.f32 %v432, %v435
          %438 = vset.pattern.permute.xlu0 2
          %439 = vperm.xlu0 %438, %v352
          %v440 = vpop.permute.xlu0 %439
          %v442 = vmul.f32 %v436, %v440
          %v443 = vmul.f32 %v437, %v440
          %v444 = vadd.f32 %v420, %v442
          %v445 = vadd.f32 %v421, %v443
          %446 = vst [vmem:[#allocation1] ss:$2 sm:$0xff] %v369
          %v447 = vld.sshfl [vmem:[#allocation1] sm:$0xff pattern:$0x75316420]
          %v448 = vld.sshfl [vmem:[#allocation1 + $0x8] sm:$0xff pattern:$0x75316420]
          %451 = vrot.lane.b32.xlu0 %v447, 1
          %v452 = vpop.permute.xlu0 %451
          %453 = vrot.lane.b32.xlu0 %v448, 1
          %v454 = vpop.permute.xlu0 %453
          %vm455 = vcmp.lt.s32.totalorder %v381, 1
          %v456 = vsel %vm455, %v452, %v454
          %v457 = vsel %vm455, %v454, %v452
          %v458 = vperm.slane %v353, 3
          %v459 = vperm.slane %v354, 3
          %v460 = vmul.f32 %v457, %v458
          %v461 = vmul.f32 %v456, %v459
          %462 = vset.pattern.permute.xlu0 3
          %463 = vperm.xlu0 %462, %v352
          %v464 = vpop.permute.xlu0 %463
          %v466 = vmul.f32 %v460, %v464
          %v467 = vmul.f32 %v461, %v464
          %v468 = vadd.f32 %v444, %v466
          %v469 = vadd.f32 %v445, %v467
          %470 = vset.pattern.permute.xlu0 4
          %471 = vperm.xlu0 %470, %v352
          %v472 = vpop.permute.xlu0 %471
          %v474 = vunpack.c.l.s4 839922192
          %v475 = vunpack.c.0.s8 %v474
          %v476 = vperm.slane %v472, %v475
          %v478 = vmul.f32 %v369, %v476
          %480 = vst [vmem:[#allocation1] ss:$2 sm:$0xff] %v478
          %v481 = vld.sshfl [vmem:[#allocation1] sm:$0xff pattern:$0x75316420]
          %v482 = vld.sshfl [vmem:[#allocation1 + $0x8] sm:$0xff pattern:$0x75316420]
          %v485 = vadd.f32 %v468, %v481
          %v486 = vadd.f32 %v469, %v482
          %487 = vst [vmem:[#allocation1] ss:$2 sm:$0xff] %v369
          %v488 = vld.sshfl [vmem:[#allocation1] sm:$0xff pattern:$0x75316420]
          %v489 = vld.sshfl [vmem:[#allocation1 + $0x8] sm:$0xff pattern:$0x75316420]
          %492 = vrot.lane.b32.xlu0 %v488, 127
          %v493 = vpop.permute.xlu0 %492
          %494 = vrot.lane.b32.xlu0 %v489, 127
          %v495 = vpop.permute.xlu0 %494
          %vm496 = vcmp.lt.s32.totalorder %v381, 127
          %v497 = vsel %vm496, %v493, %v495
          %v498 = vsel %vm496, %v495, %v493
          %v499 = vperm.slane %v353, 5
          %v500 = vperm.slane %v354, 5
          %v501 = vmul.f32 %v497, %v499
          %v502 = vmul.f32 %v498, %v500
          %503 = vset.pattern.permute.xlu0 5
          %504 = vperm.xlu0 %503, %v352
          %v505 = vpop.permute.xlu0 %504
          %v507 = vmul.f32 %v501, %v505
          %v508 = vmul.f32 %v502, %v505
          %v509 = vadd.f32 %v485, %v507
          %v510 = vadd.f32 %v486, %v508
          %511 = vst [vmem:[#allocation1] ss:$2 sm:$0xff] %v369
          %v512 = vld.sshfl [vmem:[#allocation1] sm:$0xff pattern:$0x75316420]
          %v513 = vld.sshfl [vmem:[#allocation1 + $0x8] sm:$0xff pattern:$0x75316420]
          %516 = vrot.lane.b32.xlu0 %v512, 113
          %v517 = vpop.permute.xlu0 %516
          %518 = vrot.lane.b32.xlu0 %v513, 113
          %v519 = vpop.permute.xlu0 %518
          %vm520 = vcmp.lt.s32.totalorder %v381, 113
          %v521 = vsel %vm520, %v517, %v519
          %v522 = vsel %vm520, %v519, %v517
          %v523 = vperm.slane %v353, 6
          %v524 = vperm.slane %v354, 6
          %v525 = vmul.f32 %v521, %v523
          %v526 = vmul.f32 %v522, %v524
          %527 = vset.pattern.permute.xlu0 6
          %528 = vperm.xlu0 %527, %v352
          %v529 = vpop.permute.xlu0 %528
          %v531 = vmul.f32 %v525, %v529
          %v532 = vmul.f32 %v526, %v529
          %v533 = vadd.f32 %v509, %v531
          %v534 = vadd.f32 %v510, %v532
          %535 = vst [vmem:[#allocation1] ss:$2 sm:$0xff] %v369
          %v536 = vld.sshfl [vmem:[#allocation1] sm:$0xff pattern:$0x75316420]
          %v537 = vld.sshfl [vmem:[#allocation1 + $0x8] sm:$0xff pattern:$0x75316420]
          %540 = vrot.lane.b32.xlu0 %v536, 112
          %v541 = vpop.permute.xlu0 %540
          %542 = vrot.lane.b32.xlu0 %v537, 112
          %v543 = vpop.permute.xlu0 %542
          %vm544 = vcmp.lt.s32.totalorder %v381, 112
          %v545 = vsel %vm544, %v541, %v543
          %v546 = vsel %vm544, %v543, %v541
          %v547 = vperm.slane %v353, 7
          %v548 = vperm.slane %v354, 7
          %v549 = vmul.f32 %v545, %v547
          %v550 = vmul.f32 %v546, %v548
          %551 = vset.pattern.permute.xlu0 7
          %552 = vperm.xlu0 %551, %v352
          %v553 = vpop.permute.xlu0 %552
          %v555 = vmul.f32 %v549, %v553
          %v556 = vmul.f32 %v550, %v553
          %v557 = vadd.f32 %v533, %v555
          %v558 = vadd.f32 %v534, %v556
          %559 = vst [vmem:[#allocation1] ss:$2 sm:$0xff] %v369
          %v560 = vld.sshfl [vmem:[#allocation1] sm:$0xff pattern:$0x75316420]
          %v561 = vld.sshfl [vmem:[#allocation1 + $0x8] sm:$0xff pattern:$0x75316420]
          %564 = vrot.lane.b32.xlu0 %v560, 111
          %v565 = vpop.permute.xlu0 %564
          %566 = vrot.lane.b32.xlu0 %v561, 111
          %v567 = vpop.permute.xlu0 %566
          %vm568 = vcmp.lt.s32.totalorder %v381, 111
          %v569 = vsel %vm568, %v565, %v567
          %v570 = vsel %vm568, %v567, %v565
          %v571 = vperm.slane %v355, 0
          %v572 = vperm.slane %v356, 0
          %v573 = vmul.f32 %v569, %v571
          %v574 = vmul.f32 %v570, %v572
          %575 = vset.pattern.permute.xlu0 8
          %576 = vperm.xlu0 %575, %v352
          %v577 = vpop.permute.xlu0 %576
          %v579 = vmul.f32 %v573, %v577
          %v580 = vmul.f32 %v574, %v577
          %v581 = vadd.f32 %v557, %v579
          %v582 = vadd.f32 %v558, %v580
          %v583 = vld [vmem:[#allocation3] sm:$0xf]
          %vm584 = vcmask 1043456
          %v585 = vsel %vm584, %v581, 0.0
          %v586 = vsel %vm584, %v582, 0.0
          %v587 = vadd.f32 %v585, %v586
          %588 = vadd.xlane.f32.xlu0 %v587
          %v589 = vpop.xlane.xlu0 %588
          %v590 = vadd.f32 %v583, %v589
          %vm591 = vcmask 3072
          %592 = vst.msk [vmem:[#allocation3] sm:$0xf] %vm591, %v590
          %v593 = vld [vmem:[#allocation4] sm:$0xf]
          %v594 = vmul.f32 %v581, %v581
          %v595 = vmul.f32 %v582, %v582
          %v596 = vsel %vm584, %v594, 0.0
          %v597 = vsel %vm584, %v595, 0.0
          %v598 = vadd.f32 %v596, %v597
          %599 = vadd.xlane.f32.xlu0 %v598
          %v600 = vpop.xlane.xlu0 %599
          %v601 = vadd.f32 %v593, %v600
          %602 = vst.msk [vmem:[#allocation4] sm:$0xf] %vm591, %v601
          %s603 = smul.u32 %s30, 2
          %v606 = vrot.slane %v582, 4
          %v607 = vsel %vm584, %v581, %v606
          %s609 = smul.u32 %s603, 2
          %s610 = smul.addr %s609, 4
          %s611 = scalar_lea.vmem [#allocation2], %s610
          %612 = vst [vmem:[%s611] sm:$0xff] %v607
          %613 = vst [vmem:[%s334] sm:$0xff] %v607
          %s614 = scalar_lea.vmem %s290, 8 [#allocation5]
          %v615 = vld [vmem:[%s614] sm:$0xff]
          %617 = vst [vmem:[#allocation1] ss:$2 sm:$0xff] %v615
          %v618 = vld.sshfl [vmem:[#allocation1] sm:$0xff pattern:$0x75316420]
          %v619 = vld.sshfl [vmem:[#allocation1 + $0x8] sm:$0xff pattern:$0x75316420]
          %622 = vrot.lane.b32.xlu0 %v618, 17
          %v623 = vpop.permute.xlu0 %622
          %624 = vrot.lane.b32.xlu0 %v619, 17
          %v625 = vpop.permute.xlu0 %624
          %v626 = vsel %vm382, %v623, %v625
          %v627 = vsel %vm382, %v625, %v623
          %v628 = vmul.f32 %v627, %v385
          %v629 = vmul.f32 %v626, %v386
          %v630 = vmul.f32 %v628, %v392
          %v631 = vmul.f32 %v629, %v392
          %v632 = vadd.f32 %v630, 0.0
          %v633 = vadd.f32 %v631, 0.0
          %634 = vst [vmem:[#allocation1] ss:$2 sm:$0xff] %v615
          %v635 = vld.sshfl [vmem:[#allocation1] sm:$0xff pattern:$0x75316420]
          %v636 = vld.sshfl [vmem:[#allocation1 + $0x8] sm:$0xff pattern:$0x75316420]
          %639 = vrot.lane.b32.xlu0 %v635, 16
          %v640 = vpop.permute.xlu0 %639
          %641 = vrot.lane.b32.xlu0 %v636, 16
          %v642 = vpop.permute.xlu0 %641
          %v643 = vsel %vm407, %v640, %v642
          %v644 = vsel %vm407, %v642, %v640
          %v645 = vmul.f32 %v644, %v410
          %v646 = vmul.f32 %v643, %v411
          %v647 = vmul.f32 %v645, %v416
          %v648 = vmul.f32 %v646, %v416
          %v649 = vadd.f32 %v632, %v647
          %v650 = vadd.f32 %v633, %v648
          %651 = vst [vmem:[#allocation1] ss:$2 sm:$0xff] %v615
          %v652 = vld.sshfl [vmem:[#allocation1] sm:$0xff pattern:$0x75316420]
          %v653 = vld.sshfl [vmem:[#allocation1 + $0x8] sm:$0xff pattern:$0x75316420]
          %656 = vrot.lane.b32.xlu0 %v652, 15
          %v657 = vpop.permute.xlu0 %656
          %658 = vrot.lane.b32.xlu0 %v653, 15
          %v659 = vpop.permute.xlu0 %658
          %v660 = vsel %vm431, %v657, %v659
          %v661 = vsel %vm431, %v659, %v657
          %v662 = vmul.f32 %v661, %v434
          %v663 = vmul.f32 %v660, %v435
          %v664 = vmul.f32 %v662, %v440
          %v665 = vmul.f32 %v663, %v440
          %v666 = vadd.f32 %v649, %v664
          %v667 = vadd.f32 %v650, %v665
          %668 = vst [vmem:[#allocation1] ss:$2 sm:$0xff] %v615
          %v669 = vld.sshfl [vmem:[#allocation1] sm:$0xff pattern:$0x75316420]
          %v670 = vld.sshfl [vmem:[#allocation1 + $0x8] sm:$0xff pattern:$0x75316420]
          %673 = vrot.lane.b32.xlu0 %v669, 1
          %v674 = vpop.permute.xlu0 %673
          %675 = vrot.lane.b32.xlu0 %v670, 1
          %v676 = vpop.permute.xlu0 %675
          %v677 = vsel %vm455, %v674, %v676
          %v678 = vsel %vm455, %v676, %v674
          %v679 = vmul.f32 %v678, %v458
          %v680 = vmul.f32 %v677, %v459
          %v681 = vmul.f32 %v679, %v464
          %v682 = vmul.f32 %v680, %v464
          %v683 = vadd.f32 %v666, %v681
          %v684 = vadd.f32 %v667, %v682
          %v685 = vmul.f32 %v615, %v476
          %687 = vst [vmem:[#allocation1] ss:$2 sm:$0xff] %v685
          %v688 = vld.sshfl [vmem:[#allocation1] sm:$0xff pattern:$0x75316420]
          %v689 = vld.sshfl [vmem:[#allocation1 + $0x8] sm:$0xff pattern:$0x75316420]
          %v692 = vadd.f32 %v683, %v688
          %v693 = vadd.f32 %v684, %v689
          %694 = vst [vmem:[#allocation1] ss:$2 sm:$0xff] %v615
          %v695 = vld.sshfl [vmem:[#allocation1] sm:$0xff pattern:$0x75316420]
          %v696 = vld.sshfl [vmem:[#allocation1 + $0x8] sm:$0xff pattern:$0x75316420]
          %699 = vrot.lane.b32.xlu0 %v695, 127
          %v700 = vpop.permute.xlu0 %699
          %701 = vrot.lane.b32.xlu0 %v696, 127
          %v702 = vpop.permute.xlu0 %701
          %v703 = vsel %vm496, %v700, %v702
          %v704 = vsel %vm496, %v702, %v700
          %v705 = vmul.f32 %v703, %v499
          %v706 = vmul.f32 %v704, %v500
          %v707 = vmul.f32 %v705, %v505
          %v708 = vmul.f32 %v706, %v505
          %v709 = vadd.f32 %v692, %v707
          %v710 = vadd.f32 %v693, %v708
          %711 = vst [vmem:[#allocation1] ss:$2 sm:$0xff] %v615
          %v712 = vld.sshfl [vmem:[#allocation1] sm:$0xff pattern:$0x75316420]
          %v713 = vld.sshfl [vmem:[#allocation1 + $0x8] sm:$0xff pattern:$0x75316420]
          %716 = vrot.lane.b32.xlu0 %v712, 113
          %v717 = vpop.permute.xlu0 %716
          %718 = vrot.lane.b32.xlu0 %v713, 113
          %v719 = vpop.permute.xlu0 %718
          %v720 = vsel %vm520, %v717, %v719
          %v721 = vsel %vm520, %v719, %v717
          %v722 = vmul.f32 %v720, %v523
          %v723 = vmul.f32 %v721, %v524
          %v724 = vmul.f32 %v722, %v529
          %v725 = vmul.f32 %v723, %v529
          %v726 = vadd.f32 %v709, %v724
          %v727 = vadd.f32 %v710, %v725
          %728 = vst [vmem:[#allocation1] ss:$2 sm:$0xff] %v615
          %v729 = vld.sshfl [vmem:[#allocation1] sm:$0xff pattern:$0x75316420]
          %v730 = vld.sshfl [vmem:[#allocation1 + $0x8] sm:$0xff pattern:$0x75316420]
          %733 = vrot.lane.b32.xlu0 %v729, 112
          %v734 = vpop.permute.xlu0 %733
          %735 = vrot.lane.b32.xlu0 %v730, 112
          %v736 = vpop.permute.xlu0 %735
          %v737 = vsel %vm544, %v734, %v736
          %v738 = vsel %vm544, %v736, %v734
          %v739 = vmul.f32 %v737, %v547
          %v740 = vmul.f32 %v738, %v548
          %v741 = vmul.f32 %v739, %v553
          %v742 = vmul.f32 %v740, %v553
          %v743 = vadd.f32 %v726, %v741
          %v744 = vadd.f32 %v727, %v742
          %745 = vst [vmem:[#allocation1] ss:$2 sm:$0xff] %v615
          %v746 = vld.sshfl [vmem:[#allocation1] sm:$0xff pattern:$0x75316420]
          %v747 = vld.sshfl [vmem:[#allocation1 + $0x8] sm:$0xff pattern:$0x75316420]
          %750 = vrot.lane.b32.xlu0 %v746, 111
          %v751 = vpop.permute.xlu0 %750
          %752 = vrot.lane.b32.xlu0 %v747, 111
          %v753 = vpop.permute.xlu0 %752
          %v754 = vsel %vm568, %v751, %v753
          %v755 = vsel %vm568, %v753, %v751
          %v756 = vmul.f32 %v754, %v571
          %v757 = vmul.f32 %v755, %v572
          %v758 = vmul.f32 %v756, %v577
          %v759 = vmul.f32 %v757, %v577
          %v760 = vadd.f32 %v743, %v758
          %v761 = vadd.f32 %v744, %v759
          %v762 = vld [vmem:[#allocation3] sm:$0xf]
          %v763 = vsel %vm584, %v760, 0.0
          %v764 = vsel %vm584, %v761, 0.0
          %v765 = vadd.f32 %v763, %v764
          %766 = vadd.xlane.f32.xlu0 %v765
          %v767 = vpop.xlane.xlu0 %766
          %v768 = vadd.f32 %v762, %v767
          %769 = vst.msk [vmem:[#allocation3] sm:$0xf] %vm591, %v768
          %v770 = vld [vmem:[#allocation4] sm:$0xf]
          %v771 = vmul.f32 %v760, %v760
          %v772 = vmul.f32 %v761, %v761
          %v773 = vsel %vm584, %v771, 0.0
          %v774 = vsel %vm584, %v772, 0.0
          %v775 = vadd.f32 %v773, %v774
          %776 = vadd.xlane.f32.xlu0 %v775
          %v777 = vpop.xlane.xlu0 %776
          %v778 = vadd.f32 %v770, %v777
          %779 = vst.msk [vmem:[#allocation4] sm:$0xf] %vm591, %v778
          %s780 = sadd.s32 %s603, 1
          %v783 = vrot.slane %v761, 4
          %v784 = vsel %vm584, %v760, %v783
          %s786 = smul.u32 %s780, 2
          %s787 = smul.addr %s786, 4
          %s788 = scalar_lea.vmem [#allocation2], %s787
          %789 = vst [vmem:[%s788] sm:$0xff] %v784
          %s790 = scalar_lea.vmem %s334, 8 [#allocation10]
          %791 = vst [vmem:[%s790] sm:$0xff] %v784
        $region56: #{tpu_custom_call.1} parent=39 // pred_fallthru
          _
        %p792 = scmp.eq.s32.totalorder %s29, 1
        // Predicated region
        $region57: #{tpu_custom_call.1} parent=39 // pred_check
          %p793 = pneg %p792
        $region58: #{tpu_custom_call.1} parent=39 // pred_check_branch
          %795 = sbr.rel (%p793) target = $region60
        $region59: #{tpu_custom_call.1} parent=39 // pred_region
          %v796 = vld [vmem:[#allocation3] sm:$0xf]
          %v797 = vmul.f32 %v796, 0.001953125
          %v798 = vld [vmem:[#allocation4] sm:$0xf]
          %v799 = vmul.f32 %v798, 0.001953125
          %v800 = vmul.f32 %v797, %v797
          %v801 = vsub.f32 %v799, %v800
          %v802 = vmax.f32 %v801, 0.0
          %v803 = vld [vmem:[%s345] sm:$0xf]
          %v804 = vadd.f32 %v802, 1e-05
          %v805 = vrsqrt.pop %v804
          %v806 = vmul.f32 %v805, %v804
          %v807 = vmul.f32 %v806, %v805
          %v808 = vmul.f32 0.5, %v807
          %v809 = vsub.f32 1.5, %v808
          %v810 = vmul.f32 %v805, %v809
          %vm811 = vweird.f32 %v804
          %vm812 = vweird.f32 %v805
          %vm813 = vmor %vm811, %vm812
          %v814 = vsel %vm813, %v805, %v810
          %v815 = vmul.f32 %v803, %v814
          %v816 = vld [vmem:[%s349] sm:$0xf]
          %v817 = vmul.f32 %v797, %v815
          %v818 = vsub.f32 %v816, %v817
          %s819 = smul.u32 %s30, 2
          %s820 = smul.u32 %s819, 2
          %s821 = smul.addr %s820, 4
          %s822 = scalar_lea.vmem [#allocation2], %s821
          %v823 = vld [vmem:[%s822] sm:$0xff]
          %825 = vset.pattern.permute.xlu0 0
          %826 = vperm.xlu0 %825, %v815
          %v827 = vpop.permute.xlu0 %826
          %v829 = vunpack.c.l.s4 839922192
          %v830 = vunpack.c.0.s8 %v829
          %v831 = vperm.slane %v827, %v830
          %v833 = vmul.f32 %v823, %v831
          %835 = vset.pattern.permute.xlu0 0
          %836 = vperm.xlu0 %835, %v818
          %v837 = vpop.permute.xlu0 %836
          %v839 = vunpack.c.l.s4 839922192
          %v840 = vunpack.c.0.s8 %v839
          %v841 = vperm.slane %v837, %v840
          %v843 = vadd.f32 %v833, %v841
          %844 = vst [vmem:[%s334] sm:$0xff] %v843
          %s845 = sadd.s32 %s819, 1
          %s846 = smul.u32 %s845, 2
          %s847 = smul.addr %s846, 4
          %s848 = scalar_lea.vmem [#allocation2], %s847
          %v849 = vld [vmem:[%s848] sm:$0xff]
          %v850 = vmul.f32 %v849, %v831
          %v851 = vadd.f32 %v850, %v841
          %s852 = scalar_lea.vmem %s334, 8 [#allocation10]
          %853 = vst [vmem:[%s852] sm:$0xff] %v851
        $region60: #{tpu_custom_call.1} parent=39 // pred_fallthru
          _
        %s854 = sand.u32 %s185, 1
        %s855 = scalar_lea.sflag [#allocation7], %s854
        %s856 = sand.u32 %s185, 1
        %s857 = smul.addr %s856, 16
        %s858 = scalar_lea.vmem [#allocation10], %s857
        // Predicated region
        $region61: #{tpu_custom_call.1} parent=39 // pred_check
          %p859 = pneg %p195
        $region62: #{tpu_custom_call.1} parent=39 // pred_check_branch
          %861 = sbr.rel (%p859) target = $region64
        $region63: #{tpu_custom_call.1} parent=39 // pred_region
          %s862 = smul.u32 %s30, %s29
          %s863 = smul.u32 2, %s862
          %865 = vsyncadd %s855, 0
          %s866 = smul.addr %s28, 2
          %s867 = smul.addr %s863, 2
          %s868 = sadd.s32 %s866, %s867
          %s869 = smul.addr %s868, 4
          %s870 = scalar_lea.hbm %s5, %s869
          %s871 = sshll.u32 %s858, 4
          %s872 = int_to_ptr.vmem [resolvable:$true] %s871
          %s873 = sshll.u32 %s870, 4
          %s874 = int_to_ptr.hbm [resolvable:$true] %s873
          %879 = dma.vmem_to_hbm [thread:$0]  %s872, 256, %s874, %s855, 128, 128, 8
        $region64: #{tpu_custom_call.1} parent=39 // pred_fallthru
          _
      $region40: #{tpu_custom_call.1} parent=5 // pred_fallthru
        _
      %p880 = scmp.le.s32.totalorder 2, %s18
      // Predicated region
      $region65: #{tpu_custom_call.1} parent=5 // pred_check
        %p881 = pneg %p880
      $region66: #{tpu_custom_call.1} parent=5 // pred_check_branch
        %883 = sbr.rel (%p881) target = $region68
      $region67: #{tpu_custom_call.1} parent=5 // pred_region
        %s884 = ssub.s32 %s18, 2
        // Predicated region
        $region69: #{tpu_custom_call.1} parent=67 // pred_check
          %p885 = pneg %p201
        $region70: #{tpu_custom_call.1} parent=67 // pred_check_branch
          %887 = sbr.rel (%p885) target = $region72
        $region71: #{tpu_custom_call.1} parent=67 // pred_region
          %s888 = sand.u32 %s186, 1
          %s889 = scalar_lea.sflag [#allocation7], %s888
          %s890 = sand.u32 %s186, 1
          %s891 = smul.addr %s890, 16
          %s892 = scalar_lea.vmem [#allocation10], %s891
          %894 = dma.done %s889, 256
        $region72: #{tpu_custom_call.1} parent=67 // pred_fallthru
          _
      $region68: #{tpu_custom_call.1} parent=5 // pred_fallthru
        _
    $region6: #{tpu_custom_call.1} parent=1 // loop_footer
      %s22 = sadd.s32 1, %s18
    $region7: #{tpu_custom_call.1} parent=1 // loop_footer_branch
      %17 = sbr.rel target = $region3
    $region8: #{tpu_custom_call.1} parent=1 // loop_exit
      _
    %895 = vsyncpa [#allocation6], 1
    %s896 = scalar_lea.sflag [#allocation6], 1
    %897 = vsyncpa %s896, 1
    %898 = vsyncpa [#allocation9], 1
    %899 = vsyncpa [#allocation7], 1
    %s900 = scalar_lea.sflag [#allocation7], 1
    %901 = vsyncpa %s900, 1

</llo_original>
